<compile_context>
chip_gen: v7x
topology: tpu7x:2x2x1
jax: 0.10.0
libtpu: 0.0.40
codegen_flags: <defaults>
</compile_context>

<pallas_src>
import functools

import jax
import jax.numpy as jnp
from jax import lax
from jax.experimental import pallas as pl
from jax.experimental.pallas import tpu as pltpu


# ----------------------------------------------------------------------------- helpers
def _round_up(x: int, m: int) -> int:
    return ((x + m - 1) // m) * m


def _row_bytes(width: int, itemsize: int) -> int:
    # VMEM rows are lane-padded to 128.
    return _round_up(width, 128) * itemsize


def _vmem_limit(est_bytes: int) -> int:
    # Floor at the v6e/v7x default scoped limit (32 MiB), cap below the smallest
    # physical VMEM across chips (v7x: 64 MiB).
    return int(min(max(est_bytes, 32 * 1024 * 1024), 64 * 1024 * 1024))


def _tiles(n: int, block_n: int, sub_rows: int, min_grid: int = 4):
    """Pick the row tile (bn), the in-kernel sub-chunk (sub) and padded N."""
    # Cap bn so the grid keeps >= min_grid steps (2 TensorCores on v7x).
    bn_cap = max(8, _round_up(pl.cdiv(n, min_grid), 8))
    bn = max(8, min(_round_up(block_n, 8), bn_cap))
    sub = max(8, min(_round_up(sub_rows, 8), bn))
    bn = _round_up(bn, sub)              # bn = whole number of sub-chunks
    n_pad = _round_up(n, bn)
    return bn, sub, n_pad


def _choose_layout(char_len: int, t: int, k: int):
    p = char_len - k + 1
    if p < 1:
        raise ValueError("char_len must be >= kernel_size")
    q = 128 // t if (t <= 128 and 128 % t == 0) else 1   # positions packed per 128 lanes
    p_pad = _round_up(p, q)
    return p, p_pad, q


def _default_fuse() -> bool:
    """Fold the embedding gather into the kernel only on chips with MXU headroom."""
    try:
        kind = jax.devices()[0].device_kind.lower()
    except Exception:
        return True
    return not any(tag in kind for tag in ("v2", "v3", "v4", "v5"))


# ----------------------------------------------------------------------------- weight builders (XLA glue, tiny)
def _conv_weight_taps(conv_w, char_len: int, p_pad: int):
    """conv_w [T,1,E,K] -> W [C*E, P_pad*T], rows char-major (c*E+e), cols position-major.

    W[c*E+e, p*T+t] = conv_w[t,0,e,c-p] if 0 <= c-p < K and p < P else 0.
    Char-major rows make x = gather(emb).reshape(N, C*E) a zero-copy reshape.
    """
    t_out, _, e, k = conv_w.shape
    c = char_len
    p = c - k + 1
    w_ekt = jnp.transpose(conv_w[:, 0], (1, 2, 0))            # [E, K, T]
    c_idx = jnp.arange(c)
    p_idx = jnp.arange(p_pad)
    k_rel = c_idx[:, None] - p_idx[None, :]                   # [C, P_pad]
    valid = (k_rel >= 0) & (k_rel < k) & (p_idx[None, :] < p)
    k_cl = jnp.clip(k_rel, 0, k - 1)
    gath = w_ekt[:, k_cl, :]                                  # [E, C, P_pad, T]
    gath = jnp.where(valid[None, :, :, None], gath, 0.0)
    return jnp.transpose(gath, (1, 0, 2, 3)).reshape(c * e, p_pad * t_out)


def _fused_conv_table(emb_table_f32, conv_w_f32, char_len: int, p_pad: int):
    """A[c, v, p*T+t] = sum_e emb[v,e] * conv_w[t,0,e,c-p]  (built in f32)."""
    c = char_len
    t_out = conv_w_f32.shape[0]
    e = conv_w_f32.shape[2]
    w_taps = _conv_weight_taps(conv_w_f32, c, p_pad)          # [C*E, P_pad*T]
    return jnp.einsum("ve,cej->cvj", emb_table_f32,
                      w_taps.reshape(c, e, p_pad * t_out),
                      precision=lax.Precision.HIGHEST)        # [C, V, P_pad*T]


def _build_fused_weights(emb_table_f32, conv_w_f32, char_len: int, p_pad: int, q: int):
    """Per-group slabs A_g [ (Q+K-1)*V, Q*T ] covering only the chars that can
    contribute to that group's positions (halves the MXU work vs. a flat 512-row RHS)."""
    c = char_len
    v = emb_table_f32.shape[0]
    t_out = conv_w_f32.shape[0]
    k = conv_w_f32.shape[-1]
    a_full = _fused_conv_table(emb_table_f32, conv_w_f32, c, p_pad)
    a2 = a_full.reshape(c * v, p_pad * t_out)
    g_num = p_pad // q
    w_chars = min(c, q + k - 1)
    c0 = [max(0, min(gg * q, c - w_chars)) for gg in range(g_num)]
    slabs = [a2[c0[gg] * v:(c0[gg] + w_chars) * v,
                gg * q * t_out:(gg + 1) * q * t_out] for gg in range(g_num)]
    a_grouped = jnp.stack(slabs, axis=0).astype(jnp.bfloat16)   # [G, W*V, Q*T]
    return a_grouped, tuple(c0)


def _build_onehot_consts(char_len: int, v: int):
    """sel[c, l] = (l // V == c) for the lane-broadcast matmul; vlane[l] = l % V."""
    cv = char_len * v
    lane = jnp.arange(cv)
    sel = (lane[None, :] // v == jnp.arange(char_len)[:, None]).astype(jnp.bfloat16)
    vlane = (lane % v).astype(jnp.float32).reshape(1, cv)
    return sel, vlane


# ----------------------------------------------------------------------------- kernels
def _pool_store(m, bias, o_ref, r0, rows, *, t, q):
    """m: [rows, q*t] f32 (padded slots already -inf).  Pool over the q position
    slots packed along lanes with XLU rolls, add bias, ReLU, store."""
    shift = (q * t) // 2
    while shift >= t:
        m = jnp.maximum(m, pltpu.roll(m, shift=shift, axis=1))
        shift //= 2
    pooled = m[:, 0:t]
    o_ref[pl.ds(r0, rows), :] = jnp.maximum(pooled + bias, 0.0).astype(o_ref.dtype)


def _char_cnn_kernel(x_ref, w_ref, b_ref, o_ref, *, sub, t, p, p_pad, q):
    # x_ref: [bn, C*E] bf16 (char-major columns -> no wrapper transpose)
    # w_ref: [C*E, P_pad*T] bf16 (resident) ; b_ref: [1, T] f32 ; o_ref: [bn, T] f32
    bias = b_ref[...]
    n_sub = x_ref.shape[0] // sub
    pad = p_pad - p
    pad_mask = None
    if q > 1 and pad > 0:
        lane = lax.broadcasted_iota(jnp.int32, (sub, q * t), 1)
        pad_mask = lane >= (q - pad) * t

    @pl.loop(0, n_sub)
    def _body(i):
        r0 = pl.multiple_of(i * sub, sub)
        xs = x_ref[pl.ds(r0, sub), :]
        # One wide MXU matmul: every conv output position at once, f32 accumulation.
        y = jnp.dot(xs, w_ref[...], preferred_element_type=jnp.float32)   # [sub, P_pad*T]
        if q > 1:
            g = (p_pad * t) // 128
            m = None
            for gg in range(g):
                blk = y[:, gg * 128:(gg + 1) * 128]
                if pad_mask is not None and gg == g - 1:
                    blk = jnp.where(pad_mask, -jnp.inf, blk)
                m = blk if m is None else jnp.maximum(m, blk)
            _pool_store(m, bias, o_ref, r0, sub, t=t, q=q)
        else:
            pooled = y[:, 0:t]
            for pp in range(1, p):
                pooled = jnp.maximum(pooled, y[:, pp * t:(pp + 1) * t])
            o_ref[pl.ds(r0, sub), :] = jnp.maximum(pooled + bias, 0.0).astype(o_ref.dtype)


def _char_cnn_fused_kernel(ids_ref, a_ref, b_ref, sel_ref, vl_ref, o_ref, *,
                           sub, t, p, p_pad, q, v_size, group_char0):
    # ids_ref: [bn, C] int32 ; a_ref: [G, W*V, Q*T] bf16 (embedding folded in)
    # b_ref: [1, T] f32 ; sel_ref: [C, C*V] bf16 ; vl_ref: [1, C*V] f32 ; o_ref: [bn, T] f32
    bias = b_ref[...]
    sel = sel_ref[...]
    vlane = vl_ref[...]
    g_num = a_ref.shape[0]
    wv = a_ref.shape[1]
    n_sub = ids_ref.shape[0] // sub
    pad = p_pad - p
    pad_mask = None
    if pad > 0:
        lane = lax.broadcasted_iota(jnp.int32, (sub, q * t), 1)
        pad_mask = lane >= (q - pad) * t

    @pl.loop(0, n_sub)
    def _body(i):
        r0 = pl.multiple_of(i * sub, sub)
        # Lane-broadcast the char ids with a tiny matmul: idb[n, c*V+v] = ids[n, c].
        ids_f = ids_ref[pl.ds(r0, sub), :].astype(jnp.bfloat16)            # [sub, C]
        idb = jnp.dot(ids_f, sel, preferred_element_type=jnp.float32)      # [sub, C*V]
        m = None
        for gg in range(g_num):
            s0 = group_char0[gg] * v_size
            oh = jnp.where(idb[:, s0:s0 + wv] == vlane[:, s0:s0 + wv],
                           1.0, 0.0).astype(jnp.bfloat16)                  # [sub, W*V]
            y = jnp.dot(oh, a_ref[gg], preferred_element_type=jnp.float32)  # [sub, Q*T]
            if pad_mask is not None and gg == g_num - 1:
                y = jnp.where(pad_mask, -jnp.inf, y)
            m = y if m is None else jnp.maximum(m, y)
        _pool_store(m, bias, o_ref, r0, sub, t=t, q=q)


# ----------------------------------------------------------------------------- pallas_call wrappers
def _pallas_char_cnn(x, w_wide, bias, *, block_n, sub_rows, t, p, p_pad, q):
    n, ec = x.shape
    bn, sub, n_pad = _tiles(n, block_n, sub_rows)
    if n_pad != n:
        x = jnp.pad(x, ((0, n_pad - n), (0, 0)))
    grid = (n_pad // bn,)
    kern = functools.partial(_char_cnn_kernel, sub=sub, t=t, p=p, p_pad=p_pad, q=q)
    est = (2 * bn * (_row_bytes(ec, 2) + _row_bytes(t, 4))
           + 2 * (w_wide.size * 2) + (6 << 20))
    out = pl.pallas_call(
        kern,
        out_shape=jax.ShapeDtypeStruct((n_pad, t), jnp.float32),
        grid_spec=pltpu.PrefetchScalarGridSpec(
            num_scalar_prefetch=0,
            grid=grid,
            in_specs=[
                pl.BlockSpec((bn, ec), lambda i: (i, 0)),            # streamed words
                pl.BlockSpec(tuple(w_wide.shape), lambda i: (0, 0)),  # resident weights
                pl.BlockSpec(tuple(bias.shape), lambda i: (0, 0)),    # resident bias
            ],
            out_specs=pl.BlockSpec((bn, t), lambda i: (i, 0)),
        ),
        compiler_params=pltpu.CompilerParams(
            dimension_semantics=("parallel",),
            vmem_limit_bytes=_vmem_limit(est),
        ),
    )(x, w_wide, bias)
    return out[:n] if n_pad != n else out


def _pallas_char_cnn_fused(ids2d, a_grouped, bias, sel, vlane, *, block_n, sub_rows,
                           t, p, p_pad, q, v_size, group_char0):
    n, c = ids2d.shape
    bn, sub, n_pad = _tiles(n, block_n, sub_rows)
    if n_pad != n:
        ids2d = jnp.pad(ids2d, ((0, n_pad - n), (0, 0)))   # id 0 = padding row, sliced off
    grid = (n_pad // bn,)
    kern = functools.partial(_char_cnn_fused_kernel, sub=sub, t=t, p=p, p_pad=p_pad,
                             q=q, v_size=v_size, group_char0=group_char0)
    est = (2 * bn * (_row_bytes(c, 4) + _row_bytes(t, 4))
           + 2 * (a_grouped.size * 2) + (8 << 20))
    out = pl.pallas_call(
        kern,
        out_shape=jax.ShapeDtypeStruct((n_pad, t), jnp.float32),
        grid_spec=pltpu.PrefetchScalarGridSpec(
            num_scalar_prefetch=0,
            grid=grid,
            in_specs=[
                pl.BlockSpec((bn, c), lambda i: (i, 0)),                    # streamed ids
                pl.BlockSpec(tuple(a_grouped.shape), lambda i: (0, 0, 0)),   # resident slabs
                pl.BlockSpec(tuple(bias.shape), lambda i: (0, 0)),
                pl.BlockSpec(tuple(sel.shape), lambda i: (0, 0)),
                pl.BlockSpec(tuple(vlane.shape), lambda i: (0, 0)),
            ],
            out_specs=pl.BlockSpec((bn, t), lambda i: (i, 0)),
        ),
        compiler_params=pltpu.CompilerParams(
            dimension_semantics=("parallel",),
            vmem_limit_bytes=_vmem_limit(est),
        ),
    )(ids2d, a_grouped, bias, sel, vlane)
    return out[:n] if n_pad != n else out


# ----------------------------------------------------------------------------- public forward
def character_embedding_forward(ids, emb_table, conv_w, conv_b, *, kernel_size,
                                block_n=8192, sub_rows=512, fuse_embedding=None):
    """
    ids:       int32 [B, S, C]
    emb_table: f32   [V, E]   (padding row already zeroed, as nn.Embedding does)
    conv_w:    f32   [T, 1, E, K]  (PyTorch Conv2d weight layout)
    conv_b:    f32   [T]
    returns    f32   [B, S, T]
    """
    b, s, c = ids.shape
    v, e = emb_table.shape
    t = conv_w.shape[0]
    k = kernel_size
    n = b * s
    p, p_pad, q = _choose_layout(c, t, k)
    bias = conv_b.reshape(1, t).astype(jnp.float32)

    fusable = (t <= 128) and (128 % t == 0) and (v <= 256)
    if fuse_embedding is None:
        fuse_embedding = fusable and _default_fuse()
    fuse_embedding = bool(fuse_embedding) and fusable

    if fuse_embedding:
        a_grouped, c0 = _build_fused_weights(emb_table.astype(jnp.float32),
                                             conv_w.astype(jnp.float32), c, p_pad, q)
        sel, vlane = _build_onehot_consts(c, v)
        ids2d = ids.reshape(n, c).astype(jnp.int32)
        out = _pallas_char_cnn_fused(ids2d, a_grouped, bias, sel, vlane,
                                     block_n=block_n, sub_rows=sub_rows,
                                     t=t, p=p, p_pad=p_pad, q=q, v_size=v,
                                     group_char0=c0)
    else:
        # bf16 gather; reshape is zero-copy because the kernel weights are laid out
        # char-major (row = c*E + e) -- no swapaxes / extra HBM pass.
        emb = jnp.take(emb_table.astype(jnp.bfloat16), ids, axis=0)   # [B,S,C,E]
        x = emb.reshape(n, c * e)                                     # [N, C*E]
        w_wide = _conv_weight_taps(conv_w.astype(jnp.float32), c, p_pad).astype(jnp.bfloat16)
        out = _pallas_char_cnn(x, w_wide, bias, block_n=block_n, sub_rows=sub_rows,
                               t=t, p=p, p_pad=p_pad, q=q)
    return out.reshape(b, s, t)


# ----------------------------------------------------------------------------- references (pure JAX)
def ref_forward(ids, emb_table, conv_w, conv_b):
    b, s, c = ids.shape
    e = emb_table.shape[1]
    t = conv_w.shape[0]
    k = conv_w.shape[-1]
    p = c - k + 1
    emb = jnp.take(emb_table, ids, axis=0)                     # [B,S,C,E]
    emb = jnp.swapaxes(emb, -1, -2).reshape(b * s, e, c)       # [N,E,C]
    conv = jnp.stack(
        [jnp.einsum("nec,tec->nt", emb[:, :, pp:pp + k], conv_w[:, 0],
                    precision=lax.Precision.HIGHEST) for pp in range(p)],
        axis=-1) + conv_b[None, :, None]                       # [N,T,P]
    return jnp.max(jnp.maximum(conv, 0.0), axis=-1).reshape(b, s, t)


def ref_forward_fused_matched(ids, emb_table, conv_w, conv_b, p_pad):
    """Reference matching the fused kernel's rounding (A built in f32, rounded once to bf16)."""
    b, s, c = ids.shape
    t = conv_w.shape[0]
    p = c - conv_w.shape[-1] + 1
    a_full = _fused_conv_table(emb_table.astype(jnp.float32),
                               conv_w.astype(jnp.float32), c, p_pad)
    a_bf = a_full.astype(jnp.bfloat16).astype(jnp.float32)     # [C, V, P_pad*T]
    n = b * s
    ids2 = ids.reshape(n, c)
    y = jnp.zeros((n, p_pad * t), jnp.float32)
    for cc in range(c):
        y = y + a_bf[cc][ids2[:, cc]]
    y = y.reshape(n, p_pad, t)[:, :p, :]
    y = jnp.maximum(y + conv_b[None, None, :], 0.0)
    return jnp.max(y, axis=1).reshape(b, s, t)


# ----------------------------------------------------------------------------- demo / self-test
if __name__ == "__main__":
    vocabulary_size = 32
    character_embedding_size = 8    # E
    token_embedding_size = 32       # T
    kernel_size = 5                 # K
    padding_index = 0
    batch_size, seq_len, char_len = 2, 8, 16   # B, S, C  (E*C = 128)

    key = jax.random.PRNGKey(0)
    k_ids, k_emb, k_w, k_b = jax.random.split(key, 4)

    ids = jax.random.randint(k_ids, (batch_size, seq_len, char_len),
                             0, vocabulary_size, dtype=jnp.int32)
    emb_table = 0.1 * jax.random.normal(
        k_emb, (vocabulary_size, character_embedding_size), dtype=jnp.float32)
    emb_table = emb_table.at[padding_index].set(0.0)   # nn.Embedding(padding_idx=...)
    conv_w = 0.1 * jax.random.normal(
        k_w, (token_embedding_size, 1, character_embedding_size, kernel_size),
        dtype=jnp.float32)
    conv_b = 0.01 * jax.random.normal(k_b, (token_embedding_size,), dtype=jnp.float32)

    # References.
    ref_f32 = ref_forward(ids, emb_table, conv_w, conv_b)
    ref_bf16 = ref_forward(ids,
                           emb_table.astype(jnp.bfloat16).astype(jnp.float32),
                           conv_w.astype(jnp.bfloat16).astype(jnp.float32),
                           conv_b)
    _, p_pad, _ = _choose_layout(char_len, token_embedding_size, kernel_size)
    ref_fused = ref_forward_fused_matched(ids, emb_table, conv_w, conv_b, p_pad)

    # Run both kernel variants (unfused = v5e path, fused = v6e/v7x path).
    results = {}
    for fuse in (False, True):
        fwd = jax.jit(functools.partial(character_embedding_forward,
                                        kernel_size=kernel_size,
                                        block_n=8192, sub_rows=512,
                                        fuse_embedding=fuse))
        out = jax.block_until_ready(fwd(ids, emb_table, conv_w, conv_b))
        assert out.shape == (batch_size, seq_len, token_embedding_size)
        results[fuse] = out

    assert jnp.allclose(results[False], ref_bf16, atol=2e-3, rtol=2e-3), \
        "unfused kernel mismatch vs bf16-matched reference"
    assert jnp.allclose(results[False], ref_f32, atol=2e-2, rtol=2e-2), \
        "unfused kernel mismatch vs f32 reference"
    assert jnp.allclose(results[True], ref_fused, atol=2e-3, rtol=2e-3), \
        "fused kernel mismatch vs matched reference"
    assert jnp.allclose(results[True], ref_f32, atol=2e-2, rtol=2e-2), \
        "fused kernel mismatch vs f32 reference"

    print("KERNEL_OK")
</pallas_src>

<mosaic_0001>
module attributes {stable_mosaic.version = 11 : i64} {
  func.func @_char_cnn_kernel(%arg0: i32, %arg1: memref<8x128xbf16, #tpu.memory_space<vmem>>, %arg2: memref<128x384xbf16, #tpu.memory_space<vmem>>, %arg3: memref<1x32xf32, #tpu.memory_space<vmem>>, %arg4: memref<8x32xf32, #tpu.memory_space<vmem>>) attributes {dimension_semantics = [#tpu.dimension_semantics<parallel>], iteration_bounds = array<i64: 2>, scalar_prefetch = 0 : i64, scratch_operands = 0 : i64, tpu.core_type = #tpu.core_type<tc>, window_params = [{transform_indices = @transform_0, window_bounds = array<i64: 8, 128>}, {pipeline_mode = #tpu.pipeline_mode<synchronous>, transform_indices = @transform_1, window_bounds = array<i64: 128, 384>}, {pipeline_mode = #tpu.pipeline_mode<synchronous>, transform_indices = @transform_2, window_bounds = array<i64: 1, 32>}, {transform_indices = @transform_3, window_bounds = array<i64: 8, 32>}]} {
    %c0 = arith.constant 0 : index
    %c0_0 = arith.constant 0 : index
    %0 = vector.load %arg3[%c0, %c0_0] : memref<1x32xf32, #tpu.memory_space<vmem>>, vector<1x32xf32>
    %c0_i32 = arith.constant 0 : i32
    %c1_i32 = arith.constant 1 : i32
    %1 = arith.muli %c0_i32, %c1_i32 : i32
    %c0_i32_1 = arith.constant 0 : i32
    %2 = arith.addi %c0_i32_1, %1 : i32
    %c8_i32 = arith.constant 8 : i32
    %3 = arith.muli %2, %c8_i32 : i32
    %4 = tpu.assume_multiple %3, 8 : i32
    %5 = arith.index_cast %4 : i32 to index
    %c0_2 = arith.constant 0 : index
    %6 = vector.load %arg1[%5, %c0_2] : memref<8x128xbf16, #tpu.memory_space<vmem>>, vector<8x128xbf16>
    %c0_3 = arith.constant 0 : index
    %c0_4 = arith.constant 0 : index
    %7 = vector.load %arg2[%c0_3, %c0_4] : memref<128x384xbf16, #tpu.memory_space<vmem>>, vector<128x384xbf16>
    %cst = arith.constant dense<0.000000e+00> : vector<8x384xf32>
    %8 = tpu.matmul %6, %7, %cst {dimension_numbers = #tpu.dot_dimension_numbers<[1], [0], [0], [1], [0, 0, 1, 1], [], []>} : vector<8x128xbf16>, vector<128x384xbf16>, vector<8x384xf32> -> vector<8x384xf32>
    %9 = vector.extract_strided_slice %8 {offsets = [0, 0], sizes = [8, 128], strides = [1, 1]} : vector<8x384xf32> to vector<8x128xf32>
    %10 = vector.extract_strided_slice %8 {offsets = [0, 128], sizes = [8, 128], strides = [1, 1]} : vector<8x384xf32> to vector<8x128xf32>
    %11 = arith.maximumf %9, %10 : vector<8x128xf32>
    %12 = vector.extract_strided_slice %8 {offsets = [0, 256], sizes = [8, 128], strides = [1, 1]} : vector<8x384xf32> to vector<8x128xf32>
    %13 = arith.maximumf %11, %12 : vector<8x128xf32>
    %c64_i32 = arith.constant 64 : i32
    %14 = tpu.dynamic_rotate %13 by %c64_i32 dim 1 : vector<8x128xf32>, i32 -> vector<8x128xf32>
    %15 = arith.maximumf %13, %14 : vector<8x128xf32>
    %c32_i32 = arith.constant 32 : i32
    %16 = tpu.dynamic_rotate %15 by %c32_i32 dim 1 : vector<8x128xf32>, i32 -> vector<8x128xf32>
    %17 = arith.maximumf %15, %16 : vector<8x128xf32>
    %18 = vector.extract_strided_slice %17 {offsets = [0, 0], sizes = [8, 32], strides = [1, 1]} : vector<8x128xf32> to vector<8x32xf32>
    %19 = vector.broadcast %0 : vector<1x32xf32> to vector<8x32xf32>
    %20 = arith.addf %18, %19 : vector<8x32xf32>
    %cst_5 = arith.constant 0.000000e+00 : f32
    %21 = vector.broadcast %cst_5 : f32 to vector<8x32xf32>
    %22 = arith.maximumf %20, %21 : vector<8x32xf32>
    %23 = arith.index_cast %4 : i32 to index
    %c0_6 = arith.constant 0 : index
    %24 = vector.load %arg4[%23, %c0_6] : memref<8x32xf32, #tpu.memory_space<vmem>>, vector<8x32xf32>
    tpu.vector_store %arg4[%23, %c0_6], %22 {strides = array<i32>} : memref<8x32xf32, #tpu.memory_space<vmem>>, vector<8x32xf32>,
    %c1_i32_7 = arith.constant 1 : i32
    return
  }
  func.func @transform_0(%arg0: i32) -> (i32, i32) {
    %c0_i32 = arith.constant 0 : i32
    %c0_i32_0 = arith.constant 0 : i32
    return %arg0, %c0_i32 : i32, i32
  }
  func.func @transform_1(%arg0: i32) -> (i32, i32) {
    %c0_i32 = arith.constant 0 : i32
    %c0_i32_0 = arith.constant 0 : i32
    %c0_i32_1 = arith.constant 0 : i32
    return %c0_i32, %c0_i32_0 : i32, i32
  }
  func.func @transform_2(%arg0: i32) -> (i32, i32) {
    %c0_i32 = arith.constant 0 : i32
    %c0_i32_0 = arith.constant 0 : i32
    %c0_i32_1 = arith.constant 0 : i32
    return %c0_i32, %c0_i32_0 : i32, i32
  }
  func.func @transform_3(%arg0: i32) -> (i32, i32) {
    %c0_i32 = arith.constant 0 : i32
    %c0_i32_0 = arith.constant 0 : i32
    return %arg0, %c0_i32 : i32, i32
  }
}

</mosaic_0001>

<llo_original>
// kernel: character_embedding_forward.1
$region0: #{character_embedding_forward.1}
  #allocation0 [shape = 'u32[]', space=smem, size = 0x4, offset = 0x4, fixed_abs, tag = 'smem constant byte address 0x4 - core index']
  #allocation1 [shape = 'u32[144,128]{1,0:T(1,128)}', space=vmem, size = 0x12000, scoped, tag = 'internal scratch']
  %s0 = inlined_call_operand.vmem [shape: bf16[16,128], index: 0, kind: input, shape index: {}]
  %s1 = inlined_call_operand.vmem [shape: bf16[128,384], index: 1, kind: input, shape index: {}]
  %s2 = inlined_call_operand.vmem [shape: f32[1,32], index: 2, kind: input, shape index: {}]
  %s3 = inlined_call_operand.hbm [shape: f32[16,32], index: 3, kind: output, shape index: {}]
  %s4 = sld [smem:[#allocation0]]
  $region45: #{character_embedding_forward.1} parent=0
    _
  %s6 = ssub.s32 1, %s4
  %s7 = scalar_select 0, %s6, %s4
  $region1: #{character_embedding_forward.1} parent=0
    #allocation2 [shape = 'u8[8192]{0}', space=vmem, size = 0x2000, scoped, tag = 'output window, operand 0']
    #allocation3 [shape = 's32[2]{0}', space=sflag, size = 0x8, scoped, tag = 'scoped memory for character_embedding_forward.1']
    %8 = vsyncpa [#allocation3], 0
    %s9 = scalar_lea.sflag [#allocation3], 1
    %10 = vsyncpa %s9, 0
    loop: start=0, step=1, limit=4
    $region2: #{character_embedding_forward.1} parent=1 // loop_pre_header
      _
    $region3: #{character_embedding_forward.1} parent=1 // loop_header
      %s12 = sphi 0, %s16
      %p13 = scmp.ge.s32.totalorder %s12, 4
      %s22 = sphi 0, %s24
      %s25 = sphi 0, %s22
      %s26 = sphi 0, %s25
      %s42 = sphi 0, %s26
      %s46 = sphi 0, %s46
      %s48 = sphi 0, %s46
      %s49 = sphi 0, %s48
      %s63 = sphi 0, %s49
      %s67 = sphi 0, %s67
      %s69 = sphi 0, %s67
      %s70 = sphi 0, %s69
      %s84 = sphi 0, %s70
      %s90 = sphi 0, %s92
      %s93 = sphi 0, %s90
      %s94 = sphi 0, %s93
      %s110 = sphi 0, %s94
    $region4: #{character_embedding_forward.1} parent=1 // loop_header_branch
      %15 = sbr.rel (%p13) target = $region8
    $region5: #{character_embedding_forward.1} parent=1 // loop_body
      %s17 = ssub.s32 %s12, 1
      %s18 = ssub.s32 %s12, 2
      %s19 = sadd.s32 %s12, 1
      %s20 = ssub.s32 %s12, %s19
      %p21 = scmp.eq.s32.totalorder %s20, 0
      %s23 = sadd.s32 %s22, 1
      %s24 = scalar_select %p21, %s22, %s23
      %p27 = pneg %p21
      %p28 = scmp.eq.s32.totalorder %s12, 1
      %p29 = por %p27, %p28
      %p30 = scmp.ne.s32.totalorder %s22, %s25
      %p31 = scmp.eq.s32.totalorder %s12, 0
      %p32 = por %p30, %p31
      %p33 = scmp.ne.s32.totalorder %s22, %s25
      %p34 = scmp.eq.s32.totalorder %s17, 1
      %p35 = por %p33, %p34
      %p36 = scmp.ne.s32.totalorder %s25, %s26
      %p37 = scmp.eq.s32.totalorder %s17, 0
      %p38 = por %p36, %p37
      %p39 = scmp.ne.s32.totalorder %s25, %s26
      %p40 = scmp.eq.s32.totalorder %s18, 1
      %p41 = por %p39, %p40
      %p43 = scmp.ne.s32.totalorder %s26, %s42
      %p44 = scmp.eq.s32.totalorder %s18, 0
      %p45 = por %p43, %p44
      %s47 = sadd.s32 %s46, 1
      %p50 = scmp.eq.s32.totalorder %s12, 1
      %p51 = scmp.ne.s32.totalorder %s46, %s48
      %p52 = scmp.eq.s32.totalorder %s12, 0
      %p53 = por %p51, %p52
      %p54 = scmp.ne.s32.totalorder %s46, %s48
      %p55 = scmp.eq.s32.totalorder %s17, 1
      %p56 = por %p54, %p55
      %p57 = scmp.ne.s32.totalorder %s48, %s49
      %p58 = scmp.eq.s32.totalorder %s17, 0
      %p59 = por %p57, %p58
      %p60 = scmp.ne.s32.totalorder %s48, %s49
      %p61 = scmp.eq.s32.totalorder %s18, 1
      %p62 = por %p60, %p61
      %p64 = scmp.ne.s32.totalorder %s49, %s63
      %p65 = scmp.eq.s32.totalorder %s18, 0
      %p66 = por %p64, %p65
      %s68 = sadd.s32 %s67, 1
      %p71 = scmp.eq.s32.totalorder %s12, 1
      %p72 = scmp.ne.s32.totalorder %s67, %s69
      %p73 = scmp.eq.s32.totalorder %s12, 0
      %p74 = por %p72, %p73
      %p75 = scmp.ne.s32.totalorder %s67, %s69
      %p76 = scmp.eq.s32.totalorder %s17, 1
      %p77 = por %p75, %p76
      %p78 = scmp.ne.s32.totalorder %s69, %s70
      %p79 = scmp.eq.s32.totalorder %s17, 0
      %p80 = por %p78, %p79
      %p81 = scmp.ne.s32.totalorder %s69, %s70
      %p82 = scmp.eq.s32.totalorder %s18, 1
      %p83 = por %p81, %p82
      %p85 = scmp.ne.s32.totalorder %s70, %s84
      %p86 = scmp.eq.s32.totalorder %s18, 0
      %p87 = por %p85, %p86
      %s88 = ssub.s32 %s12, %s19
      %p89 = scmp.eq.s32.totalorder %s88, 0
      %s91 = sadd.s32 %s90, 1
      %s92 = scalar_select %p89, %s90, %s91
      %p95 = pneg %p89
      %p96 = scmp.eq.s32.totalorder %s12, 1
      %p97 = por %p95, %p96
      %p98 = scmp.ne.s32.totalorder %s90, %s93
      %p99 = scmp.eq.s32.totalorder %s12, 0
      %p100 = por %p98, %p99
      %p101 = scmp.ne.s32.totalorder %s90, %s93
      %p102 = scmp.eq.s32.totalorder %s17, 1
      %p103 = por %p101, %p102
      %p104 = scmp.ne.s32.totalorder %s93, %s94
      %p105 = scmp.eq.s32.totalorder %s17, 0
      %p106 = por %p104, %p105
      %p107 = scmp.ne.s32.totalorder %s93, %s94
      %p108 = scmp.eq.s32.totalorder %s18, 1
      %p109 = por %p107, %p108
      %p111 = scmp.ne.s32.totalorder %s94, %s110
      %p112 = scmp.eq.s32.totalorder %s18, 0
      %p113 = por %p111, %p112
      %p114 = scmp.le.s32.totalorder 1, %s12
      %p115 = scmp.lt.s32.totalorder %s12, 3
      %p116 = pnand %p114, %p115
      %p117 = pneg %p116
      // Predicated region
      $region9: #{character_embedding_forward.1} parent=5 // pred_check
        _
      $region10: #{character_embedding_forward.1} parent=5 // pred_check_branch
        %119 = sbr.rel (%p116) target = $region12
      $region11: #{character_embedding_forward.1} parent=5 // pred_region
        %s120 = ssub.s32 %s12, 1
        // Predicated region
        $region13: #{character_embedding_forward.1} parent=11 // pred_check
          %p121 = pneg %p59
        $region14: #{character_embedding_forward.1} parent=11 // pred_check_branch
          %123 = sbr.rel (%p121) target = $region16
        $region15: #{character_embedding_forward.1} parent=11 // pred_region
          _
        $region16: #{character_embedding_forward.1} parent=11 // pred_fallthru
          _
        // Predicated region
        $region17: #{character_embedding_forward.1} parent=11 // pred_check
          %p124 = pneg %p80
        $region18: #{character_embedding_forward.1} parent=11 // pred_check_branch
          %126 = sbr.rel (%p124) target = $region20
        $region19: #{character_embedding_forward.1} parent=11 // pred_region
          _
        $region20: #{character_embedding_forward.1} parent=11 // pred_fallthru
          _
      $region12: #{character_embedding_forward.1} parent=5 // pred_fallthru
        _
      %p127 = scmp.lt.s32.totalorder %s12, 2
      // Predicated region
      $region21: #{character_embedding_forward.1} parent=5 // pred_check
        %p128 = pneg %p127
      $region22: #{character_embedding_forward.1} parent=5 // pred_check_branch
        %130 = sbr.rel (%p128) target = $region24
      $region23: #{character_embedding_forward.1} parent=5 // pred_region
        // Predicated region
        $region25: #{character_embedding_forward.1} parent=23 // pred_check
          %p131 = pneg %p32
        $region26: #{character_embedding_forward.1} parent=23 // pred_check_branch
          %133 = sbr.rel (%p131) target = $region28
        $region27: #{character_embedding_forward.1} parent=23 // pred_region
          %p134 = scmp.lt.s32.totalorder %s12, 1
          %s135 = scalar_select %p134, %s12, 1
          %s136 = smul.addr %s135, 4
          %s137 = scalar_lea.vmem %s0, %s136
        $region28: #{character_embedding_forward.1} parent=23 // pred_fallthru
          _
      $region24: #{character_embedding_forward.1} parent=5 // pred_fallthru
        _
      %p138 = scmp.le.s32.totalorder 1, %s12
      %p139 = scmp.lt.s32.totalorder %s12, 3
      %p140 = pnand %p138, %p139
      %p141 = pneg %p140
      // Predicated region
      $region29: #{character_embedding_forward.1} parent=5 // pred_check
        _
      $region30: #{character_embedding_forward.1} parent=5 // pred_check_branch
        %143 = sbr.rel (%p140) target = $region32
      $region31: #{character_embedding_forward.1} parent=5 // pred_region
        %s144 = ssub.s32 %s12, 1
        %p145 = scmp.lt.s32.totalorder %s17, 1
        %s146 = scalar_select %p145, %s17, 1
        %s147 = smul.addr %s146, 4
        %s148 = scalar_lea.vmem %s0, %s147
        %p149 = pneg %p38
        %p150 = pneg %p35
        %p151 = pneg %p59
        %p152 = pneg %p56
        %p153 = pneg %p80
        %p154 = pneg %p77
        %p155 = pneg %p106
        %p156 = pneg %p103
        %s157 = sand.u32 %s93, 1
        %s158 = scalar_lea.sflag [#allocation3], %s157
        %s159 = sand.u32 %s93, 1
        %s160 = smul.addr %s159, 8
        %s161 = scalar_lea.vmem [#allocation2], %s160
        %p162 = scmp.lt.s32.totalorder %s17, 1
        %s163 = scalar_select %p162, %s17, 1
        %s164 = smul.addr %s163, 4
        %s165 = scalar_lea.vmem %s0, %s164
        %v167 = vld [vmem:[%s2] sm:$0x1]
        %v168 = vld [vmem:[%s165] sm:$0xf]
        %v169 = vld [vmem:[%s1] sm:$0xff]
        %v170 = vld [vmem:[%s1 + $0x8] sm:$0xf]
        %v171 = vld [vmem:[%s1 + $0xc] sm:$0xff]
        %v172 = vld [vmem:[%s1 + $0x14] sm:$0xf]
        %v173 = vld [vmem:[%s1 + $0x18] sm:$0xff]
        %v174 = vld [vmem:[%s1 + $0x20] sm:$0xf]
        %v175 = vld [vmem:[%s1 + $0x24] sm:$0xff]
        %v176 = vld [vmem:[%s1 + $0x2c] sm:$0xf]
        %v177 = vld [vmem:[%s1 + $0x30] sm:$0xff]
        %v178 = vld [vmem:[%s1 + $0x38] sm:$0xf]
        %v179 = vld [vmem:[%s1 + $0x3c] sm:$0xff]
        %v180 = vld [vmem:[%s1 + $0x44] sm:$0xf]
        %v181 = vld [vmem:[%s1 + $0x48] sm:$0xff]
        %v182 = vld [vmem:[%s1 + $0x50] sm:$0xf]
        %v183 = vld [vmem:[%s1 + $0x54] sm:$0xff]
        %v184 = vld [vmem:[%s1 + $0x5c] sm:$0xf]
        %v185 = vld [vmem:[%s1 + $0x60] sm:$0xff]
        %v186 = vld [vmem:[%s1 + $0x68] sm:$0xf]
        %v187 = vld [vmem:[%s1 + $0x6c] sm:$0xff]
        %v188 = vld [vmem:[%s1 + $0x74] sm:$0xf]
        %v189 = vld [vmem:[%s1 + $0x78] sm:$0xff]
        %v190 = vld [vmem:[%s1 + $0x80] sm:$0xf]
        %v191 = vld [vmem:[%s1 + $0x84] sm:$0xff]
        %v192 = vld [vmem:[%s1 + $0x8c] sm:$0xf]
        %v193 = vld [vmem:[%s1 + $0x90] sm:$0xff]
        %v194 = vld [vmem:[%s1 + $0x98] sm:$0xf]
        %v195 = vld [vmem:[%s1 + $0x9c] sm:$0xff]
        %v196 = vld [vmem:[%s1 + $0xa4] sm:$0xf]
        %v197 = vld [vmem:[%s1 + $0xa8] sm:$0xff]
        %v198 = vld [vmem:[%s1 + $0xb0] sm:$0xf]
        %v199 = vld [vmem:[%s1 + $0xb4] sm:$0xff]
        %v200 = vld [vmem:[%s1 + $0xbc] sm:$0xf]
        %v233 = vunpack.c.l.b16 %v169
        %v234 = vunpack.c.h.b16 %v169
        %v235 = vunpack.c.l.b16 %v170
        %v236 = vunpack.c.l.b16 %v171
        %v237 = vunpack.c.h.b16 %v171
        %v238 = vunpack.c.l.b16 %v172
        %v239 = vunpack.c.l.b16 %v173
        %v240 = vunpack.c.h.b16 %v173
        %v241 = vunpack.c.l.b16 %v174
        %v242 = vunpack.c.l.b16 %v175
        %v243 = vunpack.c.h.b16 %v175
        %v244 = vunpack.c.l.b16 %v176
        %v245 = vunpack.c.l.b16 %v177
        %v246 = vunpack.c.h.b16 %v177
        %v247 = vunpack.c.l.b16 %v178
        %v248 = vunpack.c.l.b16 %v179
        %v249 = vunpack.c.h.b16 %v179
        %v250 = vunpack.c.l.b16 %v180
        %v251 = vunpack.c.l.b16 %v181
        %v252 = vunpack.c.h.b16 %v181
        %v253 = vunpack.c.l.b16 %v182
        %v254 = vunpack.c.l.b16 %v183
        %v255 = vunpack.c.h.b16 %v183
        %v256 = vunpack.c.l.b16 %v184
        %v257 = vunpack.c.l.b16 %v185
        %v258 = vunpack.c.h.b16 %v185
        %v259 = vunpack.c.l.b16 %v186
        %v260 = vunpack.c.l.b16 %v187
        %v261 = vunpack.c.h.b16 %v187
        %v262 = vunpack.c.l.b16 %v188
        %v263 = vunpack.c.l.b16 %v189
        %v264 = vunpack.c.h.b16 %v189
        %v265 = vunpack.c.l.b16 %v190
        %v266 = vunpack.c.l.b16 %v191
        %v267 = vunpack.c.h.b16 %v191
        %v268 = vunpack.c.l.b16 %v192
        %v269 = vunpack.c.l.b16 %v193
        %v270 = vunpack.c.h.b16 %v193
        %v271 = vunpack.c.l.b16 %v194
        %v272 = vunpack.c.l.b16 %v195
        %v273 = vunpack.c.h.b16 %v195
        %v274 = vunpack.c.l.b16 %v196
        %v275 = vunpack.c.l.b16 %v197
        %v276 = vunpack.c.h.b16 %v197
        %v277 = vunpack.c.l.b16 %v198
        %v278 = vunpack.c.l.b16 %v199
        %v279 = vunpack.c.h.b16 %v199
        %v280 = vunpack.c.l.b16 %v200
        %v281 = vpack.c.b16 %v236, %v233
        %v282 = vpack.c.b16 %v237, %v234
        %v283 = vpack.c.b16 %v238, %v235
        %v284 = vpack.c.b16 %v242, %v239
        %v285 = vpack.c.b16 %v243, %v240
        %v286 = vpack.c.b16 %v244, %v241
        %v287 = vpack.c.b16 %v248, %v245
        %v288 = vpack.c.b16 %v249, %v246
        %v289 = vpack.c.b16 %v250, %v247
        %v290 = vpack.c.b16 %v254, %v251
        %v291 = vpack.c.b16 %v255, %v252
        %v292 = vpack.c.b16 %v256, %v253
        %v293 = vpack.c.b16 %v260, %v257
        %v294 = vpack.c.b16 %v261, %v258
        %v295 = vpack.c.b16 %v262, %v259
        %v296 = vpack.c.b16 %v266, %v263
        %v297 = vpack.c.b16 %v267, %v264
        %v298 = vpack.c.b16 %v268, %v265
        %v299 = vpack.c.b16 %v272, %v269
        %v300 = vpack.c.b16 %v273, %v270
        %v301 = vpack.c.b16 %v274, %v271
        %v302 = vpack.c.b16 %v278, %v275
        %v303 = vpack.c.b16 %v279, %v276
        %v304 = vpack.c.b16 %v280, %v277
        %329 = vmatprep.subr.bf16.mxu0 %v282
        %330 = vmatpush1.bf16.msra.mxu0 %v281
        %331 = vmatprep.subr.bf16.mxu0 %v285
        %332 = vmatpush1.bf16.msra.mxu0 %v284
        %333 = vmatprep.subr.bf16.mxu0 %v288
        %334 = vmatpush1.bf16.msra.mxu0 %v287
        %335 = vmatprep.subr.bf16.mxu0 %v291
        %336 = vmatpush1.bf16.msra.mxu0 %v290
        %337 = vmatprep.subr.bf16.mxu0 %v294
        %338 = vmatpush1.bf16.msra.mxu0 %v293
        %339 = vmatprep.subr.bf16.mxu0 %v297
        %340 = vmatpush1.bf16.msra.mxu0 %v296
        %341 = vmatprep.subr.bf16.mxu0 %v300
        %342 = vmatpush1.bf16.msra.mxu0 %v299
        %343 = vmatprep.subr.bf16.mxu0 %v303
        %344 = vmatpush1.bf16.msra.mxu0 %v302
        %345 = vmatprep.subr.bf16.mxu0 0
        %346 = vmatpush1.bf16.msra.mxu0 0
        %347 = vmatprep.subr.bf16.mxu0 0
        %348 = vmatpush1.bf16.msra.mxu0 0
        %349 = vmatprep.subr.bf16.mxu0 0
        %350 = vmatpush1.bf16.msra.mxu0 0
        %351 = vmatprep.subr.bf16.mxu0 0
        %352 = vmatpush1.bf16.msra.mxu0 0
        %353 = vmatprep.subr.bf16.mxu0 0
        %354 = vmatpush1.bf16.msra.mxu0 0
        %355 = vmatprep.subr.bf16.mxu0 0
        %356 = vmatpush1.bf16.msra.mxu0 0
        %357 = vmatprep.subr.bf16.mxu0 0
        %358 = vmatpush1.bf16.msra.mxu0 0
        %359 = vmatprep.subr.bf16.mxu0 0
        %360 = vmatpush1.bf16.msra.mxu0 0
        %361 = vmatprep.mubr.bf16.mxu0 0
        %362 = vmatmul.mubr.bf16.gmra.mrb[0].mxu0 %v168
        %v363 = vpop.f32.mrb[0].mxu0
        %v364 = vadd.f32 0.0, %v363
        %v365 = vpop.f32.mrb[0].mxu0
        %v366 = vadd.f32 0.0, %v365
        %v367 = vpop.f32.mrb[0].mxu0
        %v368 = vpop.f32.mrb[0].mxu0
        %369 = vdwg.mxu0
        %370 = vmatprep.subr.bf16.mxu0 0
        %371 = vmatpush1.bf16.msra.mxu0 %v283
        %372 = vmatprep.subr.bf16.mxu0 0
        %373 = vmatpush1.bf16.msra.mxu0 %v286
        %374 = vmatprep.subr.bf16.mxu0 0
        %375 = vmatpush1.bf16.msra.mxu0 %v289
        %376 = vmatprep.subr.bf16.mxu0 0
        %377 = vmatpush1.bf16.msra.mxu0 %v292
        %378 = vmatprep.subr.bf16.mxu0 0
        %379 = vmatpush1.bf16.msra.mxu0 %v295
        %380 = vmatprep.subr.bf16.mxu0 0
        %381 = vmatpush1.bf16.msra.mxu0 %v298
        %382 = vmatprep.subr.bf16.mxu0 0
        %383 = vmatpush1.bf16.msra.mxu0 %v301
        %384 = vmatprep.subr.bf16.mxu0 0
        %385 = vmatpush1.bf16.msra.mxu0 %v304
        %386 = vmatprep.subr.bf16.mxu0 0
        %387 = vmatpush1.bf16.msra.mxu0 0
        %388 = vmatprep.subr.bf16.mxu0 0
        %389 = vmatpush1.bf16.msra.mxu0 0
        %390 = vmatprep.subr.bf16.mxu0 0
        %391 = vmatpush1.bf16.msra.mxu0 0
        %392 = vmatprep.subr.bf16.mxu0 0
        %393 = vmatpush1.bf16.msra.mxu0 0
        %394 = vmatprep.subr.bf16.mxu0 0
        %395 = vmatpush1.bf16.msra.mxu0 0
        %396 = vmatprep.subr.bf16.mxu0 0
        %397 = vmatpush1.bf16.msra.mxu0 0
        %398 = vmatprep.subr.bf16.mxu0 0
        %399 = vmatpush1.bf16.msra.mxu0 0
        %400 = vmatprep.subr.bf16.mxu0 0
        %401 = vmatpush1.bf16.msra.mxu0 0
        %402 = vmatprep.mubr.bf16.mxu0 0
        %403 = vmatmul.mubr.bf16.gmra.mrb[0].mxu0 %v168
        %v404 = vpop.f32.mrb[0].mxu0
        %v405 = vadd.f32 0.0, %v404
        %v406 = vpop.f32.mrb[0].mxu0
        %v407 = vpop.f32.mrb[0].mxu0
        %v408 = vpop.f32.mrb[0].mxu0
        %409 = vdwg.mxu0
        %v410 = vmax.f32 %v364, %v366
        %v411 = vmax.f32 %v410, %v405
        %412 = vrot.lane.b32.xlu0 %v411, 64
        %v413 = vpop.permute.xlu0 %412
        %v414 = vmax.f32 %v411, %v413
        %415 = vrot.lane.b32.xlu0 %v414, 32
        %v416 = vpop.permute.xlu0 %415
        %v417 = vmax.f32 %v414, %v416
        %v419 = vlaneseq
        %v420 = vshrl.u32 %v419, 7
        %v421 = vsub.s32 0, %v420
        %v422 = vrot.slane %v167, %v421
        %v424 = vadd.f32 %v417, %v422
        %v425 = vmax.f32 %v424, 0.0
        %vm426 = vcmask 261120
        %427 = vst.msk [vmem:[%s161] sm:$0xff] %vm426, %v425
        %s428 = sand.u32 %s93, 1
        %s429 = scalar_lea.sflag [#allocation3], %s428
        %s430 = sand.u32 %s93, 1
        %s431 = smul.addr %s430, 8
        %s432 = scalar_lea.vmem [#allocation2], %s431
        // Predicated region
        $region33: #{character_embedding_forward.1} parent=31 // pred_check
          %p433 = pneg %p103
        $region34: #{character_embedding_forward.1} parent=31 // pred_check_branch
          %435 = sbr.rel (%p433) target = $region36
        $region35: #{character_embedding_forward.1} parent=31 // pred_region
          %s437 = ssub.s32 128, 128
          %438 = vsyncadd %s429, %s437
          %s439 = smul.addr %s17, 128
          %s440 = scalar_lea.hbm %s3, %s439
          %s442 = sshll.u32 %s432, 4
          %s443 = int_to_ptr.vmem [resolvable:$true] %s442
          %445 = dma.vmem_to_hbm [thread:$0]  %s443, 128, %s440, %s429
        $region36: #{character_embedding_forward.1} parent=31 // pred_fallthru
          _
      $region32: #{character_embedding_forward.1} parent=5 // pred_fallthru
        _
      %p446 = scmp.le.s32.totalorder 2, %s12
      // Predicated region
      $region37: #{character_embedding_forward.1} parent=5 // pred_check
        %p447 = pneg %p446
      $region38: #{character_embedding_forward.1} parent=5 // pred_check_branch
        %449 = sbr.rel (%p447) target = $region40
      $region39: #{character_embedding_forward.1} parent=5 // pred_region
        %s450 = ssub.s32 %s12, 2
        // Predicated region
        $region41: #{character_embedding_forward.1} parent=39 // pred_check
          %p451 = pneg %p109
        $region42: #{character_embedding_forward.1} parent=39 // pred_check_branch
          %453 = sbr.rel (%p451) target = $region44
        $region43: #{character_embedding_forward.1} parent=39 // pred_region
          %s454 = sand.u32 %s94, 1
          %s455 = scalar_lea.sflag [#allocation3], %s454
          %s456 = sand.u32 %s94, 1
          %s457 = smul.addr %s456, 8
          %s458 = scalar_lea.vmem [#allocation2], %s457
          %459 = dma.done %s455, 128
        $region44: #{character_embedding_forward.1} parent=39 // pred_fallthru
          _
      $region40: #{character_embedding_forward.1} parent=5 // pred_fallthru
        _
    $region6: #{character_embedding_forward.1} parent=1 // loop_footer
      %s16 = sadd.s32 1, %s12
    $region7: #{character_embedding_forward.1} parent=1 // loop_footer_branch
      %11 = sbr.rel target = $region3
    $region8: #{character_embedding_forward.1} parent=1 // loop_exit
      _
    %460 = vsyncpa [#allocation3], 1
    %s461 = scalar_lea.sflag [#allocation3], 1
    %462 = vsyncpa %s461, 1

</llo_original>
